<compile_context>
chip_gen: v7x
topology: tpu7x:2x2x1
jax: 0.10.0
libtpu: 0.0.40
codegen_flags: <defaults>
</compile_context>

<pallas_src>
import functools

import jax
import jax.numpy as jnp
from jax import lax
from jax.experimental import pallas as pl
from jax.experimental.pallas import tpu as pltpu


def _ceil_to(x, m):
    return ((x + m - 1) // m) * m


def _choose_tile_n(N, Dm, K, *, target_step_bytes=2 << 20,
                   vmem_tile_budget=36 * 1024 * 1024):
    """Pick a lane-dense row-tile width (multiple of 128).

    Targets >= ~2 MiB of HBM payload per grid step (so the ~0.35 us fixed
    per-step pipeline overhead is amortized) while keeping the per-step VMEM
    footprint under `vmem_tile_budget` (sized for v7x's 64 MiB VMEM).
    """
    # Resident (grid-invariant) codebook + ||w||^2, conservatively x2 buffers.
    fixed = 2 * K * Dm * 4 + 2 * K * 4
    # Per-column VMEM: double-buffered x^T column + ~5 (K,)-tall f32/i32 temps
    # (wx, dist, iota, masked_idx, slack) + idx output column (x2).
    per_col_vmem = 2 * Dm * 4 + 5 * K * 4 + 2 * 4
    col_budget = max(vmem_tile_budget - fixed, per_col_vmem * 128)
    tn_vmem = col_budget // per_col_vmem
    # Per-column HBM payload: x^T read + idx write.
    tn_hbm = max(target_step_bytes // (Dm * 4 + 4), 128)
    tn = min(tn_vmem, tn_hbm)
    # Keep >= ~8 grid steps once N is large enough (v7x megacore sharding +
    # pipeline depth); don't collapse to one giant tile.
    tn = min(tn, _ceil_to(max(pl.cdiv(N, 8), 128), 128))
    tn = max(128, (tn // 128) * 128)
    return min(tn, _ceil_to(N, 128))


def _vq_kernel(xT_ref, w_ref, wsq_ref, idx_ref, *, use_bf16_dist=False):
    """Per-tile VQ argmin in a lane-dense (rows-on-lanes) layout.

    xT_ref:  (Dm, TN)  transposed flattened-input tile
    w_ref:   (K,  Dm)  full codebook (grid-invariant)
    wsq_ref: (K,  1 )  precomputed ||w_k||^2
    idx_ref: (1,  TN)  int32 code indices (only kernel output)
    """
    xT = xT_ref[...]                                            # (Dm, TN) f32
    w = w_ref[...]                                              # (K,  Dm) f32

    if use_bf16_dist:
        # v5e MXU runs bf16 far faster than f32; argmin may flip on near-ties.
        wx = jnp.dot(w.astype(jnp.bfloat16), xT.astype(jnp.bfloat16),
                     preferred_element_type=jnp.float32)        # (K, TN)
    else:
        wx = jnp.dot(w, xT, preferred_element_type=jnp.float32)  # (K, TN) MXU

    # argmin_k ||x - w_k||^2 == argmin_k (||w_k||^2 - 2 <w_k, x>)
    dist = wsq_ref[...] - 2.0 * wx                              # (K, TN)

    K = dist.shape[0]
    k_iota = lax.broadcasted_iota(jnp.int32, dist.shape, 0)     # (K, TN)
    min_d = jnp.min(dist, axis=0, keepdims=True)                # (1, TN) XLU
    # First-occurrence tie-break (matches torch.argmin on finite data).
    idx_ref[...] = jnp.min(jnp.where(dist == min_d, k_iota, K),
                           axis=0, keepdims=True)               # (1, TN) i32


def vq_lookup(flat_input_t, codebook, *, tile_n=None, use_bf16_dist=False):
    """Nearest-codebook-row indices for all N rows.

    flat_input_t: (Dm, N) float32  (rows on the lane axis)
    codebook:     (K, Dm) float32
    returns indices (N,) int32
    """
    Dm, N = flat_input_t.shape
    K, _ = codebook.shape

    if tile_n is None:
        tile_n = _choose_tile_n(N, Dm, K)

    # Hoisted once (grid-invariant), passed into the kernel.
    w_sq = jnp.sum(codebook * codebook, axis=1, keepdims=True)  # (K, 1)

    grid = (pl.cdiv(N, tile_n),)                                # ragged tail OK
    idx = pl.pallas_call(
        functools.partial(_vq_kernel, use_bf16_dist=use_bf16_dist),
        out_shape=jax.ShapeDtypeStruct((1, N), jnp.int32),
        grid_spec=pl.GridSpec(
            grid=grid,
            in_specs=[
                pl.BlockSpec((Dm, tile_n), lambda i: (0, i)),   # x^T tile
                pl.BlockSpec((K, Dm), lambda i: (0, 0)),        # full codebook
                pl.BlockSpec((K, 1), lambda i: (0, 0)),         # ||w||^2
            ],
            out_specs=pl.BlockSpec((1, tile_n), lambda i: (0, i)),
        ),
        compiler_params=pltpu.CompilerParams(
            dimension_semantics=("parallel",),
            # > v5e(16 MiB)/v6e(32 MiB) scoped defaults, < v7x 64 MiB physical.
            vmem_limit_bytes=48 * 1024 * 1024),
    )(flat_input_t, codebook, w_sq)

    return idx[0]


class VectorQuantizerPallas:
    """Forward-pass-equivalent of the PyTorch VectorQuantizer module."""

    def __init__(self, num_embeddings, embedding_dim, commitment_cost, key):
        self.num_embeddings = num_embeddings
        self.embedding_dim = embedding_dim
        self.commitment_cost = commitment_cost
        # nn.Embedding weight (K, Dm) uniform(-1/K, 1/K), deterministic init.
        self.embeddings = jax.random.uniform(
            key, (num_embeddings, embedding_dim), dtype=jnp.float32,
            minval=-1.0 / num_embeddings, maxval=1.0 / num_embeddings)

    def __call__(self, z):
        # z: (B, C, D, H, W) with C == embedding_dim
        input_shape = z.shape
        B, C = z.shape[0], z.shape[1]

        # Single fused transpose straight to the lane-dense (Dm, N) layout:
        # column n = b*(D*H*W) + s holds z[b, :, s] -- same row ordering as
        # torch's permute(0,2,3,4,1).contiguous().view(-1, C).
        xT = jnp.transpose(z.reshape(B, C, -1), (1, 0, 2)).reshape(C, -1)

        indices = vq_lookup(xT, self.embeddings)                # (N,) int32

        # Row gather outside the kernel: exact codebook rows, natural (N, Dm)
        # layout, no post-transpose, no duplicate K-contraction on the MXU.
        quantized_flat = jnp.take(self.embeddings, indices, axis=0)

        # One-hot is a module output; materialized outside the kernel.
        # TODO(synk): if downstream only needs usage stats, replace with a
        # bincount on `indices` to avoid the N*K*4-byte HBM writeback.
        encodings = jax.nn.one_hot(
            indices, self.num_embeddings, dtype=jnp.float32)    # (N, K)

        # Reproduce torch's `.view(input_shape)` (no permute back) exactly.
        quantized = quantized_flat.reshape(input_shape)

        # detach() -> stop_gradient (forward values unchanged).
        e_latent_loss = jnp.mean((lax.stop_gradient(quantized) - z) ** 2)
        q_latent_loss = jnp.mean((quantized - lax.stop_gradient(z)) ** 2)
        loss = q_latent_loss + self.commitment_cost * e_latent_loss

        # Straight-through estimator.
        quantized_st = z + lax.stop_gradient(quantized - z)
        return quantized_st, loss, encodings


if __name__ == "__main__":
    key = jax.random.PRNGKey(0)
    k_emb, k_z = jax.random.split(key)

    num_embeddings = 16
    embedding_dim = 8
    commitment_cost = 0.25

    # Small 3D input: (B, C, D, H, W) = (2, 8, 4, 6, 7) -> N = 336 rows.
    # N is NOT a multiple of the 128-wide tile, exercising the ragged last
    # block (no explicit padding / slicing in the wrapper anymore).
    B, C, Dd, H, W = 2, embedding_dim, 4, 6, 7
    z = jax.random.normal(k_z, (B, C, Dd, H, W), dtype=jnp.float32)

    vq = VectorQuantizerPallas(num_embeddings, embedding_dim,
                               commitment_cost, k_emb)
    quantized, loss, encodings = vq(z)
    jax.block_until_ready((quantized, loss, encodings))

    # Sanity checks against a pure-JAX reference of the same math.
    flat = jnp.transpose(z, (0, 2, 3, 4, 1)).reshape(-1, embedding_dim)
    d_ref = (jnp.sum(flat ** 2, 1, keepdims=True)
             - 2.0 * flat @ vq.embeddings.T
             + jnp.sum(vq.embeddings ** 2, 1, keepdims=True).T)
    idx_ref = jnp.argmin(d_ref, axis=1)
    q_ref = vq.embeddings[idx_ref].reshape(z.shape)
    assert quantized.shape == z.shape
    assert jnp.allclose(quantized, q_ref, atol=1e-5)
    assert encodings.shape == (flat.shape[0], num_embeddings)
    assert jnp.all(jnp.argmax(encodings, axis=1) == idx_ref)
    assert jnp.allclose(loss,
                        (1.0 + commitment_cost) * jnp.mean((q_ref - z) ** 2),
                        atol=1e-5)

    print("KERNEL_OK")
</pallas_src>

<mosaic_0001>
module attributes {stable_mosaic.version = 11 : i64} {
  func.func @_vq_kernel(%arg0: i32, %arg1: memref<8x128xf32, #tpu.memory_space<vmem>>, %arg2: memref<16x8xf32, #tpu.memory_space<vmem>>, %arg3: memref<16x1xf32, #tpu.memory_space<vmem>>, %arg4: memref<1x128xi32, #tpu.memory_space<vmem>>) attributes {dimension_semantics = [#tpu.dimension_semantics<parallel>], iteration_bounds = array<i64: 3>, scalar_prefetch = 0 : i64, scratch_operands = 0 : i64, tpu.core_type = #tpu.core_type<tc>, window_params = [{transform_indices = @transform_0, window_bounds = array<i64: 8, 128>}, {pipeline_mode = #tpu.pipeline_mode<synchronous>, transform_indices = @transform_1, window_bounds = array<i64: 16, 8>}, {pipeline_mode = #tpu.pipeline_mode<synchronous>, transform_indices = @transform_2, window_bounds = array<i64: 16, 1>}, {transform_indices = @transform_3, window_bounds = array<i64: 1, 128>}]} {
    %c0 = arith.constant 0 : index
    %c0_0 = arith.constant 0 : index
    %0 = vector.load %arg1[%c0, %c0_0] : memref<8x128xf32, #tpu.memory_space<vmem>>, vector<8x128xf32>
    %c0_1 = arith.constant 0 : index
    %c0_2 = arith.constant 0 : index
    %1 = vector.load %arg2[%c0_1, %c0_2] : memref<16x8xf32, #tpu.memory_space<vmem>>, vector<16x8xf32>
    %cst = arith.constant dense<0.000000e+00> : vector<16x128xf32>
    %2 = tpu.matmul %1, %0, %cst {dimension_numbers = #tpu.dot_dimension_numbers<[1], [0], [0], [1], [0, 0, 1, 1], [], []>} : vector<16x8xf32>, vector<8x128xf32>, vector<16x128xf32> -> vector<16x128xf32>
    %c0_3 = arith.constant 0 : index
    %c0_4 = arith.constant 0 : index
    %3 = vector.load %arg3[%c0_3, %c0_4] : memref<16x1xf32, #tpu.memory_space<vmem>>, vector<16x1xf32>
    %cst_5 = arith.constant 2.000000e+00 : f32
    %4 = vector.broadcast %cst_5 : f32 to vector<16x128xf32>
    %5 = arith.mulf %4, %2 : vector<16x128xf32>
    %6 = vector.broadcast %3 : vector<16x1xf32> to vector<16x128xf32>
    %7 = arith.subf %6, %5 : vector<16x128xf32>
    %8 = tpu.iota {dimensions = array<i32: 0>} : vector<16x128xi32>
    %cst_6 = arith.constant dense<0x7F800000> : vector<128xf32>
    %9 = vector.multi_reduction <minimumf>, %7, %cst_6 [0] : vector<16x128xf32> to vector<128xf32>
    %10 = vector.shape_cast %9 : vector<128xf32> to vector<1x128xf32>
    %11 = vector.broadcast %10 : vector<1x128xf32> to vector<16x128xf32>
    %12 = arith.cmpf oeq, %7, %11 : vector<16x128xf32>
    %c16_i32 = arith.constant 16 : i32
    %13 = vector.broadcast %c16_i32 : i32 to vector<16x128xi32>
    %14 = arith.select %12, %8, %13 : vector<16x128xi1>, vector<16x128xi32>
    %cst_7 = arith.constant dense<2147483647> : vector<128xi32>
    %15 = vector.multi_reduction <minsi>, %14, %cst_7 [0] : vector<16x128xi32> to vector<128xi32>
    %16 = vector.shape_cast %15 : vector<128xi32> to vector<1x128xi32>
    %c0_8 = arith.constant 0 : index
    %c0_9 = arith.constant 0 : index
    %17 = vector.load %arg4[%c0_8, %c0_9] : memref<1x128xi32, #tpu.memory_space<vmem>>, vector<1x128xi32>
    tpu.vector_store %arg4[%c0_8, %c0_9], %16 {strides = array<i32>} : memref<1x128xi32, #tpu.memory_space<vmem>>, vector<1x128xi32>,
    return
  }
  func.func @transform_0(%arg0: i32) -> (i32, i32) {
    %c0_i32 = arith.constant 0 : i32
    %c0_i32_0 = arith.constant 0 : i32
    return %c0_i32, %arg0 : i32, i32
  }
  func.func @transform_1(%arg0: i32) -> (i32, i32) {
    %c0_i32 = arith.constant 0 : i32
    %c0_i32_0 = arith.constant 0 : i32
    %c0_i32_1 = arith.constant 0 : i32
    return %c0_i32, %c0_i32_0 : i32, i32
  }
  func.func @transform_2(%arg0: i32) -> (i32, i32) {
    %c0_i32 = arith.constant 0 : i32
    %c0_i32_0 = arith.constant 0 : i32
    %c0_i32_1 = arith.constant 0 : i32
    return %c0_i32, %c0_i32_0 : i32, i32
  }
  func.func @transform_3(%arg0: i32) -> (i32, i32) {
    %c0_i32 = arith.constant 0 : i32
    %c0_i32_0 = arith.constant 0 : i32
    return %c0_i32, %arg0 : i32, i32
  }
}

</mosaic_0001>

<llo_original>
// kernel: tpu_custom_call.1
$region0: #{tpu_custom_call.1}
  #allocation0 [shape = 'u32[]', space=smem, size = 0x4, offset = 0x4, fixed_abs, tag = 'smem constant byte address 0x4 - core index']
  #allocation1 [shape = 'u32[144,128]{1,0:T(1,128)}', space=vmem, size = 0x12000, scoped, tag = 'internal scratch']
  %s0 = inlined_call_operand.vmem [shape: f32[8,336], index: 0, kind: input, shape index: {}]
  %s1 = inlined_call_operand.vmem [shape: f32[16,8], index: 1, kind: input, shape index: {}]
  %s2 = inlined_call_operand.vmem [shape: f32[16,1], index: 2, kind: input, shape index: {}]
  %s3 = inlined_call_operand.hbm [shape: s32[1,336], index: 3, kind: output, shape index: {}]
  %s4 = sld [smem:[#allocation0]]
  $region45: #{tpu_custom_call.1} parent=0
    _
  %s6 = ssub.s32 1, %s4
  %s7 = scalar_select 0, %s6, %s4
  $region1: #{tpu_custom_call.1} parent=0
    #allocation2 [shape = 'u8[1024]{0}', space=vmem, size = 0x400, scoped, tag = 'output window, operand 0']
    #allocation3 [shape = 's32[2]{0}', space=sflag, size = 0x8, scoped, tag = 'scoped memory for tpu_custom_call.1']
    %8 = vsyncpa [#allocation3], 0
    %s9 = scalar_lea.sflag [#allocation3], 1
    %10 = vsyncpa %s9, 0
    loop: start=0, step=1, limit=5
    $region2: #{tpu_custom_call.1} parent=1 // loop_pre_header
      _
    $region3: #{tpu_custom_call.1} parent=1 // loop_header
      %s12 = sphi 0, %s16
      %p13 = scmp.ge.s32.totalorder %s12, 5
      %s22 = sphi 0, %s24
      %s25 = sphi 0, %s22
      %s26 = sphi 0, %s25
      %s42 = sphi 0, %s26
      %s46 = sphi 0, %s46
      %s48 = sphi 0, %s46
      %s49 = sphi 0, %s48
      %s63 = sphi 0, %s49
      %s67 = sphi 0, %s67
      %s69 = sphi 0, %s67
      %s70 = sphi 0, %s69
      %s84 = sphi 0, %s70
      %s90 = sphi 0, %s92
      %s93 = sphi 0, %s90
      %s94 = sphi 0, %s93
      %s110 = sphi 0, %s94
    $region4: #{tpu_custom_call.1} parent=1 // loop_header_branch
      %15 = sbr.rel (%p13) target = $region8
    $region5: #{tpu_custom_call.1} parent=1 // loop_body
      %s17 = ssub.s32 %s12, 1
      %s18 = ssub.s32 %s12, 2
      %s19 = sadd.s32 %s12, 1
      %s20 = ssub.s32 %s12, %s19
      %p21 = scmp.eq.s32.totalorder %s20, 0
      %s23 = sadd.s32 %s22, 1
      %s24 = scalar_select %p21, %s22, %s23
      %p27 = pneg %p21
      %p28 = scmp.eq.s32.totalorder %s12, 2
      %p29 = por %p27, %p28
      %p30 = scmp.ne.s32.totalorder %s22, %s25
      %p31 = scmp.eq.s32.totalorder %s12, 0
      %p32 = por %p30, %p31
      %p33 = scmp.ne.s32.totalorder %s22, %s25
      %p34 = scmp.eq.s32.totalorder %s17, 2
      %p35 = por %p33, %p34
      %p36 = scmp.ne.s32.totalorder %s25, %s26
      %p37 = scmp.eq.s32.totalorder %s17, 0
      %p38 = por %p36, %p37
      %p39 = scmp.ne.s32.totalorder %s25, %s26
      %p40 = scmp.eq.s32.totalorder %s18, 2
      %p41 = por %p39, %p40
      %p43 = scmp.ne.s32.totalorder %s26, %s42
      %p44 = scmp.eq.s32.totalorder %s18, 0
      %p45 = por %p43, %p44
      %s47 = sadd.s32 %s46, 1
      %p50 = scmp.eq.s32.totalorder %s12, 2
      %p51 = scmp.ne.s32.totalorder %s46, %s48
      %p52 = scmp.eq.s32.totalorder %s12, 0
      %p53 = por %p51, %p52
      %p54 = scmp.ne.s32.totalorder %s46, %s48
      %p55 = scmp.eq.s32.totalorder %s17, 2
      %p56 = por %p54, %p55
      %p57 = scmp.ne.s32.totalorder %s48, %s49
      %p58 = scmp.eq.s32.totalorder %s17, 0
      %p59 = por %p57, %p58
      %p60 = scmp.ne.s32.totalorder %s48, %s49
      %p61 = scmp.eq.s32.totalorder %s18, 2
      %p62 = por %p60, %p61
      %p64 = scmp.ne.s32.totalorder %s49, %s63
      %p65 = scmp.eq.s32.totalorder %s18, 0
      %p66 = por %p64, %p65
      %s68 = sadd.s32 %s67, 1
      %p71 = scmp.eq.s32.totalorder %s12, 2
      %p72 = scmp.ne.s32.totalorder %s67, %s69
      %p73 = scmp.eq.s32.totalorder %s12, 0
      %p74 = por %p72, %p73
      %p75 = scmp.ne.s32.totalorder %s67, %s69
      %p76 = scmp.eq.s32.totalorder %s17, 2
      %p77 = por %p75, %p76
      %p78 = scmp.ne.s32.totalorder %s69, %s70
      %p79 = scmp.eq.s32.totalorder %s17, 0
      %p80 = por %p78, %p79
      %p81 = scmp.ne.s32.totalorder %s69, %s70
      %p82 = scmp.eq.s32.totalorder %s18, 2
      %p83 = por %p81, %p82
      %p85 = scmp.ne.s32.totalorder %s70, %s84
      %p86 = scmp.eq.s32.totalorder %s18, 0
      %p87 = por %p85, %p86
      %s88 = ssub.s32 %s12, %s19
      %p89 = scmp.eq.s32.totalorder %s88, 0
      %s91 = sadd.s32 %s90, 1
      %s92 = scalar_select %p89, %s90, %s91
      %p95 = pneg %p89
      %p96 = scmp.eq.s32.totalorder %s12, 2
      %p97 = por %p95, %p96
      %p98 = scmp.ne.s32.totalorder %s90, %s93
      %p99 = scmp.eq.s32.totalorder %s12, 0
      %p100 = por %p98, %p99
      %p101 = scmp.ne.s32.totalorder %s90, %s93
      %p102 = scmp.eq.s32.totalorder %s17, 2
      %p103 = por %p101, %p102
      %p104 = scmp.ne.s32.totalorder %s93, %s94
      %p105 = scmp.eq.s32.totalorder %s17, 0
      %p106 = por %p104, %p105
      %p107 = scmp.ne.s32.totalorder %s93, %s94
      %p108 = scmp.eq.s32.totalorder %s18, 2
      %p109 = por %p107, %p108
      %p111 = scmp.ne.s32.totalorder %s94, %s110
      %p112 = scmp.eq.s32.totalorder %s18, 0
      %p113 = por %p111, %p112
      %p114 = scmp.le.s32.totalorder 1, %s12
      %p115 = scmp.lt.s32.totalorder %s12, 4
      %p116 = pnand %p114, %p115
      %p117 = pneg %p116
      // Predicated region
      $region9: #{tpu_custom_call.1} parent=5 // pred_check
        _
      $region10: #{tpu_custom_call.1} parent=5 // pred_check_branch
        %119 = sbr.rel (%p116) target = $region12
      $region11: #{tpu_custom_call.1} parent=5 // pred_region
        %s120 = ssub.s32 %s12, 1
        // Predicated region
        $region13: #{tpu_custom_call.1} parent=11 // pred_check
          %p121 = pneg %p59
        $region14: #{tpu_custom_call.1} parent=11 // pred_check_branch
          %123 = sbr.rel (%p121) target = $region16
        $region15: #{tpu_custom_call.1} parent=11 // pred_region
          _
        $region16: #{tpu_custom_call.1} parent=11 // pred_fallthru
          _
        // Predicated region
        $region17: #{tpu_custom_call.1} parent=11 // pred_check
          %p124 = pneg %p80
        $region18: #{tpu_custom_call.1} parent=11 // pred_check_branch
          %126 = sbr.rel (%p124) target = $region20
        $region19: #{tpu_custom_call.1} parent=11 // pred_region
          _
        $region20: #{tpu_custom_call.1} parent=11 // pred_fallthru
          _
      $region12: #{tpu_custom_call.1} parent=5 // pred_fallthru
        _
      %p127 = scmp.lt.s32.totalorder %s12, 3
      // Predicated region
      $region21: #{tpu_custom_call.1} parent=5 // pred_check
        %p128 = pneg %p127
      $region22: #{tpu_custom_call.1} parent=5 // pred_check_branch
        %130 = sbr.rel (%p128) target = $region24
      $region23: #{tpu_custom_call.1} parent=5 // pred_region
        // Predicated region
        $region25: #{tpu_custom_call.1} parent=23 // pred_check
          %p131 = pneg %p32
        $region26: #{tpu_custom_call.1} parent=23 // pred_check_branch
          %133 = sbr.rel (%p131) target = $region28
        $region27: #{tpu_custom_call.1} parent=23 // pred_region
          %p134 = scmp.lt.s32.totalorder %s12, 2
          %s135 = scalar_select %p134, %s12, 2
          %s136 = smul.addr %s135, 8
          %s137 = scalar_lea.vmem %s0, %s136
        $region28: #{tpu_custom_call.1} parent=23 // pred_fallthru
          _
      $region24: #{tpu_custom_call.1} parent=5 // pred_fallthru
        _
      %p138 = scmp.le.s32.totalorder 1, %s12
      %p139 = scmp.lt.s32.totalorder %s12, 4
      %p140 = pnand %p138, %p139
      %p141 = pneg %p140
      // Predicated region
      $region29: #{tpu_custom_call.1} parent=5 // pred_check
        _
      $region30: #{tpu_custom_call.1} parent=5 // pred_check_branch
        %143 = sbr.rel (%p140) target = $region32
      $region31: #{tpu_custom_call.1} parent=5 // pred_region
        %s144 = ssub.s32 %s12, 1
        %p145 = scmp.lt.s32.totalorder %s17, 2
        %s146 = scalar_select %p145, %s17, 2
        %s147 = smul.addr %s146, 8
        %s148 = scalar_lea.vmem %s0, %s147
        %p149 = pneg %p38
        %p150 = pneg %p35
        %p151 = pneg %p59
        %p152 = pneg %p56
        %p153 = pneg %p80
        %p154 = pneg %p77
        %p155 = pneg %p106
        %p156 = pneg %p103
        %s157 = sand.u32 %s93, 1
        %s158 = scalar_lea.sflag [#allocation3], %s157
        %s159 = sand.u32 %s93, 1
        %s160 = scalar_lea.vmem [#allocation2], %s159
        %p161 = scmp.lt.s32.totalorder %s17, 2
        %s162 = scalar_select %p161, %s17, 2
        %s163 = smul.addr %s162, 8
        %s164 = scalar_lea.vmem %s0, %s163
        %v165 = vld [vmem:[%s164] sm:$0xff]
        %v166 = vld [vmem:[%s1] sm:$0xff]
        %v167 = vld [vmem:[%s1 + $0x8] sm:$0xff]
        %vm168 = vcmask 64512
        %v170 = vsel %vm168, %v166, 0
        %v173 = vsel %vm168, %v167, 0
        %175 = vmatprep.subr.mxu0 0.0
        %176 = vmatpush1.msra.mxu0 %v165
        %177 = vmatprep.subr.mxu0 0.0
        %178 = vmatpush1.msra.mxu0 0.0
        %179 = vmatprep.subr.mxu0 0.0
        %180 = vmatpush1.msra.mxu0 0.0
        %181 = vmatprep.subr.mxu0 0.0
        %182 = vmatpush1.msra.mxu0 0.0
        %183 = vmatprep.subr.mxu0 0.0
        %184 = vmatpush1.msra.mxu0 0.0
        %185 = vmatprep.subr.mxu0 0.0
        %186 = vmatpush1.msra.mxu0 0.0
        %187 = vmatprep.subr.mxu0 0.0
        %188 = vmatpush1.msra.mxu0 0.0
        %189 = vmatprep.subr.mxu0 0.0
        %190 = vmatpush1.msra.mxu0 0.0
        %191 = vmatprep.subr.mxu0 0.0
        %192 = vmatpush1.msra.mxu0 0.0
        %193 = vmatprep.subr.mxu0 0.0
        %194 = vmatpush1.msra.mxu0 0.0
        %195 = vmatprep.subr.mxu0 0.0
        %196 = vmatpush1.msra.mxu0 0.0
        %197 = vmatprep.subr.mxu0 0.0
        %198 = vmatpush1.msra.mxu0 0.0
        %199 = vmatprep.subr.mxu0 0.0
        %200 = vmatpush1.msra.mxu0 0.0
        %201 = vmatprep.subr.mxu0 0.0
        %202 = vmatpush1.msra.mxu0 0.0
        %203 = vmatprep.subr.mxu0 0.0
        %204 = vmatpush1.msra.mxu0 0.0
        %205 = vmatprep.subr.mxu0 0.0
        %206 = vmatpush1.msra.mxu0 0.0
        %207 = vmatprep.subr.mxu0 0.0
        %208 = vmatpush1.msra.mxu0 0.0
        %209 = vmatprep.subr.mxu0 0.0
        %210 = vmatpush1.msra.mxu0 0.0
        %211 = vmatprep.subr.mxu0 0.0
        %212 = vmatpush1.msra.mxu0 0.0
        %213 = vmatprep.subr.mxu0 0.0
        %214 = vmatpush1.msra.mxu0 0.0
        %215 = vmatprep.subr.mxu0 0.0
        %216 = vmatpush1.msra.mxu0 0.0
        %217 = vmatprep.subr.mxu0 0.0
        %218 = vmatpush1.msra.mxu0 0.0
        %219 = vmatprep.subr.mxu0 0.0
        %220 = vmatpush1.msra.mxu0 0.0
        %221 = vmatprep.subr.mxu0 0.0
        %222 = vmatpush1.msra.mxu0 0.0
        %223 = vmatprep.subr.mxu0 0.0
        %224 = vmatpush1.msra.mxu0 0.0
        %225 = vmatprep.subr.mxu0 0.0
        %226 = vmatpush1.msra.mxu0 0.0
        %227 = vmatprep.subr.mxu0 0.0
        %228 = vmatpush1.msra.mxu0 0.0
        %229 = vmatprep.subr.mxu0 0.0
        %230 = vmatpush1.msra.mxu0 0.0
        %231 = vmatprep.subr.mxu0 0.0
        %232 = vmatpush1.msra.mxu0 0.0
        %233 = vmatprep.subr.mxu0 0.0
        %234 = vmatpush1.msra.mxu0 0.0
        %235 = vmatprep.subr.mxu0 0.0
        %236 = vmatpush1.msra.mxu0 0.0
        %237 = vmatprep.subr.mxu0 0.0
        %238 = vmatpush1.msra.mxu0 0.0
        %239 = vmatprep.mubr.f32.mxu0 0.0
        %240 = vmatmul.mubr.f32.gmra.mrb[0].mxu0 %v170
        %v241 = vpop.f32.mrb[0].mxu0
        %v242 = vadd.f32 0.0, %v241
        %v243 = vpop.f32.mrb[0].mxu0
        %244 = vmatprep.mubr.f32.mxu0 0.0
        %245 = vmatmul.mubr.f32.gmra.mrb[0].mxu0 %v173
        %v246 = vpop.f32.mrb[0].mxu0
        %v247 = vadd.f32 0.0, %v246
        %v248 = vpop.f32.mrb[0].mxu0
        %249 = vdwg.mxu0
        %v250 = vld [vmem:[%s2] sm:$0xff]
        %v251 = vld [vmem:[%s2 + $0x8] sm:$0xff]
        %v252 = vmul.f32 %v242, 2.0
        %v253 = vmul.f32 %v247, 2.0
        %255 = vset.pattern.permute.xlu0 0
        %256 = vperm.xlu0 %255, %v250
        %v257 = vpop.permute.xlu0 %256
        %260 = vset.pattern.permute.xlu0 0
        %261 = vperm.xlu0 %260, %v251
        %v262 = vpop.permute.xlu0 %261
        %v264 = vsub.f32 %v257, %v252
        %v265 = vsub.f32 %v262, %v253
        %v266 = vlaneseq
        %v267 = vshrl.u32 %v266, 7
        %v268 = vadd.s32 %v267, 8
        %v269 = vmin.f32 %v264, %v265
        %v270 = vrot.slane %v269, 4
        %v271 = vmin.f32 %v269, %v270
        %v272 = vrot.slane %v271, 2
        %v273 = vmin.f32 %v271, %v272
        %v274 = vrot.slane %v273, 1
        %v275 = vmin.f32 %v273, %v274
        %vm276 = vcmp.eq.f32.partialorder %v264, %v275
        %vm277 = vcmp.eq.f32.partialorder %v265, %v275
        %v278 = vsel %vm276, %v267, 16
        %v279 = vsel %vm277, %v268, 16
        %vm280 = vcmp.lt.s32.totalorder %v278, %v279
        %v281 = vsel %vm280, %v278, %v279
        %v282 = vrot.slane %v281, 4
        %vm283 = vcmp.lt.s32.totalorder %v281, %v282
        %v284 = vsel %vm283, %v281, %v282
        %v285 = vrot.slane %v284, 2
        %vm286 = vcmp.lt.s32.totalorder %v284, %v285
        %v287 = vsel %vm286, %v284, %v285
        %v288 = vrot.slane %v287, 1
        %vm289 = vcmp.lt.s32.totalorder %v287, %v288
        %v290 = vsel %vm289, %v287, %v288
        %291 = vst [vmem:[%s160] sm:$0x1] %v290
        %s292 = sand.u32 %s93, 1
        %s293 = scalar_lea.sflag [#allocation3], %s292
        %s294 = sand.u32 %s93, 1
        %s295 = scalar_lea.vmem [#allocation2], %s294
        // Predicated region
        $region33: #{tpu_custom_call.1} parent=31 // pred_check
          %p296 = pneg %p103
        $region34: #{tpu_custom_call.1} parent=31 // pred_check_branch
          %298 = sbr.rel (%p296) target = $region36
        $region35: #{tpu_custom_call.1} parent=31 // pred_region
          %s300 = ssub.s32 16, 16
          %301 = vsyncadd %s293, %s300
          %s302 = smul.addr %s17, 16
          %s303 = scalar_lea.hbm %s3, %s302
          %s305 = sshll.u32 %s295, 4
          %s306 = int_to_ptr.vmem [resolvable:$true] %s305
          %308 = dma.vmem_to_hbm [thread:$0]  %s306, 16, %s303, %s293
        $region36: #{tpu_custom_call.1} parent=31 // pred_fallthru
          _
      $region32: #{tpu_custom_call.1} parent=5 // pred_fallthru
        _
      %p309 = scmp.le.s32.totalorder 2, %s12
      // Predicated region
      $region37: #{tpu_custom_call.1} parent=5 // pred_check
        %p310 = pneg %p309
      $region38: #{tpu_custom_call.1} parent=5 // pred_check_branch
        %312 = sbr.rel (%p310) target = $region40
      $region39: #{tpu_custom_call.1} parent=5 // pred_region
        %s313 = ssub.s32 %s12, 2
        // Predicated region
        $region41: #{tpu_custom_call.1} parent=39 // pred_check
          %p314 = pneg %p109
        $region42: #{tpu_custom_call.1} parent=39 // pred_check_branch
          %316 = sbr.rel (%p314) target = $region44
        $region43: #{tpu_custom_call.1} parent=39 // pred_region
          %s317 = sand.u32 %s94, 1
          %s318 = scalar_lea.sflag [#allocation3], %s317
          %s319 = sand.u32 %s94, 1
          %s320 = scalar_lea.vmem [#allocation2], %s319
          %321 = dma.done %s318, 16
        $region44: #{tpu_custom_call.1} parent=39 // pred_fallthru
          _
      $region40: #{tpu_custom_call.1} parent=5 // pred_fallthru
        _
    $region6: #{tpu_custom_call.1} parent=1 // loop_footer
      %s16 = sadd.s32 1, %s12
    $region7: #{tpu_custom_call.1} parent=1 // loop_footer_branch
      %11 = sbr.rel target = $region3
    $region8: #{tpu_custom_call.1} parent=1 // loop_exit
      _
    %322 = vsyncpa [#allocation3], 1
    %s323 = scalar_lea.sflag [#allocation3], 1
    %324 = vsyncpa %s323, 1

</llo_original>
